<compile_context>
chip_gen: v7x
topology: tpu7x:2x2x1
jax: 0.10.0
libtpu: 0.0.40
codegen_flags: <defaults>
</compile_context>

<pallas_src>
import jax
import jax.numpy as jnp
from jax.experimental import pallas as pl
from jax.experimental.pallas import tpu as pltpu


def _bcast_copy_kernel(w_ref, o_ref):
    # w_ref: (1, CHUNK) slab of the flattened table; o_ref: (TB, CHUNK).
    # Sublane broadcast + store; the embedding lookup with pe == arange(S) is
    # the identity gather, so this is a pure broadcast copy.
    o_ref[...] = jnp.broadcast_to(w_ref[...], o_ref.shape)


def _choose_tiling(batch_size, flat_len, dtype_bytes):
    """Pick (chunk, tb): lane-dense chunk along the flattened S*D axis and a
    batch fold TB, keeping the double-buffered in+out footprint <= ~16 MiB."""
    LANE = 128
    SUBLANE = 8
    budget = 16 * 1024 * 1024  # double-buffered input + output blocks

    # Batch fold: full batch if small, else a sublane-aligned 8-row fold
    # (block heights must be a multiple of 8 or the full batch extent).
    tb = batch_size if batch_size <= SUBLANE else SUBLANE

    # Chunk: largest lane-aligned slab such that
    #   2*chunk_bytes (input, double-buffered) + 2*tb*chunk_bytes (output) <= budget.
    max_chunk_elems = budget // (2 * (1 + tb) * dtype_bytes)
    if flat_len <= max_chunk_elems:
        chunk = flat_len                      # full extent: always a legal block
    else:
        chunk = max(LANE, (max_chunk_elems // LANE) * LANE)

    # If the table slab is small, fold more batch rows per block to amortize
    # per-grid-step overhead, while staying inside the budget.
    chunk_bytes = chunk * dtype_bytes
    if tb < batch_size:
        while 2 * tb <= batch_size and (2 + 4 * tb) * chunk_bytes <= budget:
            tb *= 2                           # stays a multiple of 8
        if (2 + 2 * batch_size) * chunk_bytes <= budget:
            tb = batch_size                   # whole batch fits -> full extent
    return chunk, tb


def learned_positional_encoding(weight, batch_size):
    """weight: (max_seq_length, d_model) embedding table -> (B, S, D) output."""
    S, D = weight.shape
    L = S * D
    dtype_bytes = jnp.dtype(weight.dtype).itemsize

    chunk, tb = _choose_tiling(batch_size, L, dtype_bytes)
    n_c = pl.cdiv(L, chunk)
    n_b = pl.cdiv(batch_size, tb)

    # Free reshapes of contiguous arrays: (S, D) -> (1, S*D), out (B, S*D) -> (B, S, D).
    w_flat = weight.reshape(1, L)

    out_flat = pl.pallas_call(
        _bcast_copy_kernel,
        out_shape=jax.ShapeDtypeStruct((batch_size, L), weight.dtype),
        grid_spec=pltpu.PrefetchScalarGridSpec(
            num_scalar_prefetch=0,
            # Chunk axis OUTER, batch axis INNER: consecutive steps keep the
            # same input block index, so the table is DMA'd from HBM once per
            # chunk instead of once per (chunk, batch) step.
            grid=(n_c, n_b),
            in_specs=[pl.BlockSpec((1, chunk), lambda c, b: (0, c))],
            out_specs=pl.BlockSpec((tb, chunk), lambda c, b: (b, c)),
        ),
        compiler_params=pltpu.CompilerParams(
            # Shard the chunk axis across TensorCores (v7x megacore); sharding
            # batch would force both cores to re-read the same table tiles.
            # Batch is "arbitrary" to preserve the batch-innermost DMA reuse.
            dimension_semantics=("parallel", "arbitrary"),
            # Explicit scoped-VMEM budget: >= 2x the ~16 MiB block footprint,
            # within v7x's 64 MiB physical VMEM and fine on v5e/v6e (128 MiB).
            vmem_limit_bytes=32 * 1024 * 1024,
        ),
    )(w_flat)

    return out_flat.reshape(batch_size, S, D)


def init_params(key, max_seq_length, d_model):
    # nn.Embedding default init: weight ~ N(0, 1).
    return jax.random.normal(key, (max_seq_length, d_model), jnp.float32)


if __name__ == "__main__":
    B, S, D = 2, 8, 32  # batch, max_seq_length, d_model

    key = jax.random.PRNGKey(0)
    k_w, k_x = jax.random.split(key)
    weight = init_params(k_w, S, D)
    # x is only used for its leading (batch) dimension, matching the PyTorch forward.
    x = jax.random.normal(k_x, (B, S, D), jnp.float32)

    out = learned_positional_encoding(weight, x.shape[0])
    out = jax.block_until_ready(out)

    # Pure-JAX reference: e = embedding(arange(S)) == weight, tiled over batch.
    ref = jnp.tile(weight[None], (x.shape[0], 1, 1))
    assert out.shape == (B, S, D)
    assert jnp.allclose(out, ref)

    print("KERNEL_OK")
</pallas_src>

<mosaic_0001>
module attributes {stable_mosaic.version = 11 : i64} {
  func.func @_bcast_copy_kernel(%arg0: i32, %arg1: i32, %arg2: memref<1x256xf32, #tpu.memory_space<vmem>>, %arg3: memref<2x256xf32, #tpu.memory_space<vmem>>) attributes {dimension_semantics = [#tpu.dimension_semantics<parallel>, #tpu.dimension_semantics<arbitrary>], iteration_bounds = array<i64: 1, 1>, scalar_prefetch = 0 : i64, scratch_operands = 0 : i64, tpu.core_type = #tpu.core_type<tc>, window_params = [{transform_indices = @transform_0, window_bounds = array<i64: 1, 256>}, {transform_indices = @transform_1, window_bounds = array<i64: 2, 256>}]} {
    %c0 = arith.constant 0 : index
    %c0_0 = arith.constant 0 : index
    %0 = vector.load %arg2[%c0, %c0_0] : memref<1x256xf32, #tpu.memory_space<vmem>>, vector<1x256xf32>
    %1 = vector.shape_cast %0 : vector<1x256xf32> to vector<1x256xf32>
    %2 = vector.broadcast %1 : vector<1x256xf32> to vector<2x256xf32>
    %c0_1 = arith.constant 0 : index
    %c0_2 = arith.constant 0 : index
    %3 = vector.load %arg3[%c0_1, %c0_2] : memref<2x256xf32, #tpu.memory_space<vmem>>, vector<2x256xf32>
    tpu.vector_store %arg3[%c0_1, %c0_2], %2 {strides = array<i32>} : memref<2x256xf32, #tpu.memory_space<vmem>>, vector<2x256xf32>,
    return
  }
  func.func @transform_0(%arg0: i32, %arg1: i32) -> (i32, i32) {
    %c0_i32 = arith.constant 0 : i32
    %c0_i32_0 = arith.constant 0 : i32
    return %c0_i32, %arg0 : i32, i32
  }
  func.func @transform_1(%arg0: i32, %arg1: i32) -> (i32, i32) {
    %c0_i32 = arith.constant 0 : i32
    return %arg1, %arg0 : i32, i32
  }
}

</mosaic_0001>

<llo_original>
// kernel: tpu_custom_call.1
$region0: #{tpu_custom_call.1}
  #allocation0 [shape = 'u32[]', space=smem, size = 0x4, offset = 0x4, fixed_abs, tag = 'smem constant byte address 0x4 - core index']
  #allocation1 [shape = 'u32[144,128]{1,0:T(1,128)}', space=vmem, size = 0x12000, scoped, tag = 'internal scratch']
  %s0 = inlined_call_operand.hbm [shape: f32[1,256], index: 0, kind: input, shape index: {}]
  %s1 = inlined_call_operand.hbm [shape: f32[2,256], index: 1, kind: output, shape index: {}]
  %s2 = sld [smem:[#allocation0]]
  $region18: #{tpu_custom_call.1} parent=0
    _
  %s4 = ssub.s32 1, %s2
  %s5 = scalar_select 0, %s4, %s2
  $region1: #{tpu_custom_call.1} parent=0
    #allocation2 [shape = 'u8[1024]{0}', space=vmem, size = 0x400, scoped, tag = 'input window, operand 0, single buffered']
    #allocation3 [shape = 's32[1]{0}', space=sflag, size = 0x4, scoped, tag = 'scoped memory for tpu_custom_call.1']
    #allocation4 [shape = 's32[1]{0}', space=sflag, size = 0x4, scoped, tag = 'scoped memory for tpu_custom_call.1']
    #allocation5 [shape = 'u8[2048]{0}', space=vmem, size = 0x800, scoped, tag = 'output window, operand 0, single buffered']
    %6 = vsyncpa [#allocation3], 0
    %7 = vsyncpa [#allocation4], 0
    // Predicated region
    $region2: #{tpu_custom_call.1} parent=1 // pred_check
      _
    $region3: #{tpu_custom_call.1} parent=1 // pred_check_branch
      %9 = sbr.rel (0) target = $region5
    $region4: #{tpu_custom_call.1} parent=1 // pred_region
      %s11 = ssub.s32 32, 32
      %12 = vsyncadd [#allocation3], %s11
      %s14 = sshll.u32 [#allocation2], 4
      %s15 = int_to_ptr.vmem [resolvable:$true] %s14
      %17 = dma.hbm_to_vmem [thread:$0]  %s0, 32, %s15, [#allocation3]
    $region5: #{tpu_custom_call.1} parent=1 // pred_fallthru
      _
    // Predicated region
    $region6: #{tpu_custom_call.1} parent=1 // pred_check
      _
    $region7: #{tpu_custom_call.1} parent=1 // pred_check_branch
      %19 = sbr.rel (0) target = $region9
    $region8: #{tpu_custom_call.1} parent=1 // pred_region
      %20 = dma.done [#allocation3], 32
    $region9: #{tpu_custom_call.1} parent=1 // pred_fallthru
      _
    %v21 = vld [vmem:[#allocation2] sm:$0x3]
    %v23 = vlaneseq
    %v24 = vshrl.u32 %v23, 7
    %v25 = vsub.s32 0, %v24
    %v26 = vrot.slane %v21, %v25
    %v27 = vlaneseq
    %v28 = vshrl.u32 %v27, 7
    %v29 = vsub.s32 1, %v28
    %v30 = vrot.slane %v21, %v29
    %v31 = vcombine.low %v26, %v30
    %v33 = vunpack.c.l.s4 1983009808
    %v34 = vunpack.c.0.s8 %v33
    %v35 = vlaneseq
    %v36 = vshrl.u32 %v35, 7
    %v37 = vsub.s32 %v34, %v36
    %v38 = vrot.slane %v31, %v37
    %40 = vst [vmem:[#allocation5] sm:$0xf] %v38
    // Predicated region
    $region10: #{tpu_custom_call.1} parent=1 // pred_check
      _
    $region11: #{tpu_custom_call.1} parent=1 // pred_check_branch
      %42 = sbr.rel (0) target = $region13
    $region12: #{tpu_custom_call.1} parent=1 // pred_region
      %s44 = ssub.s32 64, 64
      %45 = vsyncadd [#allocation4], %s44
      %s47 = sshll.u32 [#allocation5], 4
      %s48 = int_to_ptr.vmem [resolvable:$true] %s47
      %50 = dma.vmem_to_hbm [thread:$0]  %s48, 64, %s1, [#allocation4]
    $region13: #{tpu_custom_call.1} parent=1 // pred_fallthru
      _
    // Predicated region
    $region14: #{tpu_custom_call.1} parent=1 // pred_check
      _
    $region15: #{tpu_custom_call.1} parent=1 // pred_check_branch
      %52 = sbr.rel (0) target = $region17
    $region16: #{tpu_custom_call.1} parent=1 // pred_region
      %53 = dma.done [#allocation4], 64
    $region17: #{tpu_custom_call.1} parent=1 // pred_fallthru
      _
    %54 = vsyncpa [#allocation3], 1
    %55 = vsyncpa [#allocation4], 1

</llo_original>
